<compile_context>
chip_gen: v7x
topology: tpu7x:2x2x1
jax: 0.10.0
libtpu: 0.0.40
codegen_flags: <defaults>
</compile_context>

<pallas_src>
import functools

import jax
import jax.numpy as jnp
from jax.experimental import pallas as pl
from jax.experimental.pallas import tpu as pltpu


def _round_up(x: int, m: int) -> int:
    return ((x + m - 1) // m) * m


@functools.lru_cache(maxsize=1)
def _tpu_generation() -> str:
    try:
        kind = jax.devices()[0].device_kind.lower()
    except Exception:  # pragma: no cover
        return "unknown"
    if "v7" in kind or "7x" in kind:
        return "v7x"
    if "v6" in kind:
        return "v6e"
    if "v5" in kind:
        return "v5e"
    return "unknown"


def _target_tiles(gen: str, in_itemsize: int):
    """Per-generation (tm, tn, tk) targets (review: >=512 M/N tiles, tk 512-1024)."""
    if in_itemsize <= 2:  # bf16 / fp8 inputs
        if gen == "v6e":
            return 1024, 1024, 512  # 128 MiB VMEM, worst FLOPs:HBM ratio -> biggest tiles
        if gen == "v7x":
            return 512, 1024, 512   # 64 MiB VMEM, 3.2 TB/s HBM -> 512x1024 crosses roofline
        return 512, 512, 512        # v5e / unknown
    # f32 inputs
    if gen == "v6e":
        return 512, 1024, 512
    return 512, 512, 512


def _pick_tile(padded_dim: int, target: int, min_tile: int) -> int:
    """Largest power-of-two tile <= target that divides padded_dim (>= min_tile)."""
    t = target
    while t > min_tile and padded_dim % t != 0:
        t //= 2
    return t


def _vmem_limit_bytes(gen, tm, tn, tk, x_item, w_item, out_item, needs_acc):
    # Double-buffered input tiles + double-buffered output tile (+ f32 acc scratch).
    footprint = (
        2 * tm * tk * x_item
        + 2 * tk * tn * w_item
        + 2 * tn * 4                 # bias tile (tiny)
        + 2 * tm * tn * out_item
    )
    if needs_acc:
        footprint += tm * tn * 4
    limit = footprint + (16 << 20)   # headroom for Mosaic internal scratch
    cap = (56 << 20) if gen == "v7x" else (100 << 20)  # 64 MiB VMEM/TC on v7x, 128 elsewhere
    return int(min(max(limit, 32 << 20), cap))


# ----------------------------- kernels --------------------------------------


def _linear_kernel_f32(x_ref, w_ref, b_ref, o_ref):
    """f32 output: accumulate directly into the resident output tile."""
    k = pl.program_id(2)

    @pl.when(k == 0)
    def _():
        # Fold the bias into the accumulator init (saves an epilogue add).
        o_ref[...] = jnp.broadcast_to(b_ref[...].astype(jnp.float32), o_ref.shape)

    # Weight tile is pre-transposed (tk, tn): standard MXU contraction.
    o_ref[...] += jnp.dot(x_ref[...], w_ref[...], preferred_element_type=jnp.float32)


def _linear_kernel_acc(x_ref, w_ref, b_ref, o_ref, acc_ref):
    """Low-precision output: f32 VMEM accumulator, cast/store on last K step."""
    k = pl.program_id(2)

    @pl.when(k == 0)
    def _():
        acc_ref[...] = jnp.broadcast_to(b_ref[...].astype(jnp.float32), acc_ref.shape)

    acc_ref[...] += jnp.dot(x_ref[...], w_ref[...], preferred_element_type=jnp.float32)

    @pl.when(k == pl.num_programs(2) - 1)
    def _():
        o_ref[...] = acc_ref[...].astype(o_ref.dtype)


# ------------------------- parameter preparation ----------------------------


def prepare_linear_params(weight, bias):
    """One-time transform (hoisted out of the per-call path):

    PyTorch (out_features, in_features) weight -> (K_pad, N_pad) RHS with the
    contraction dim on sublanes; bias padded/reshaped to (1, N_pad).
    """
    N, K = weight.shape
    K_pad = _round_up(K, 128)
    N_pad = _round_up(N, 128)

    w_t = jnp.asarray(weight).T  # (K, N)
    if (K_pad, N_pad) != (K, N):
        w_t = jnp.pad(w_t, ((0, K_pad - K), (0, N_pad - N)))

    b = jnp.asarray(bias)
    if N_pad != N:
        b = jnp.pad(b, (0, N_pad - N))
    return w_t, b.reshape(1, N_pad)


# ------------------------------ forward path --------------------------------


@functools.partial(jax.jit, static_argnames=("n_out", "tm", "tn", "tk"))
def linear_forward(x, w_p, b_p, n_out, *, tm=None, tn=None, tk=None):
    """y = x @ W.T + b, with W already prepared as w_p = pad(W.T) of shape (K_pad, N_pad)."""
    assert x.dtype == w_p.dtype, "x / weight dtype mismatch"

    *lead, K = x.shape
    K_pad, N_pad = w_p.shape
    assert K <= K_pad and K_pad - K < 128, "in_features mismatch vs prepared weight"

    x2 = x.reshape(-1, K)
    M = x2.shape[0]
    out_dtype = x.dtype

    # Pad M only to the sublane multiple (never to tm).
    M_pad = _round_up(max(M, 1), 8)

    gen = _tpu_generation()
    x_item = jnp.dtype(x.dtype).itemsize
    w_item = jnp.dtype(w_p.dtype).itemsize
    b_item = jnp.dtype(b_p.dtype).itemsize
    out_item = jnp.dtype(out_dtype).itemsize

    tm_t, tn_t, tk_t = _target_tiles(gen, x_item)
    tm = tm if tm is not None else _pick_tile(M_pad, tm_t, 8)
    tn = tn if tn is not None else _pick_tile(N_pad, tn_t, 128)
    tk = tk if tk is not None else _pick_tile(K_pad, tk_t, 128)

    # v7x megacore: guarantee >=2 "parallel" output tiles so both TCs get work.
    if gen == "v7x":
        while (M_pad // tm) * (N_pad // tn) < 2 and tn >= 256:
            tn //= 2
        while (M_pad // tm) * (N_pad // tn) < 2 and tm >= 16:
            tm //= 2

    # Pad x only when needed (aligned shapes skip the HBM round-trip).
    if (M_pad, K_pad) != (M, K):
        x2 = jnp.pad(x2, ((0, M_pad - M), (0, K_pad - K)))

    grid = (M_pad // tm, N_pad // tn, K_pad // tk)

    needs_acc = out_dtype != jnp.float32
    if needs_acc:
        kernel = _linear_kernel_acc
        scratch_shapes = [pltpu.VMEM((tm, tn), jnp.float32)]
    else:
        kernel = _linear_kernel_f32
        scratch_shapes = []

    cost = pl.CostEstimate(
        flops=2 * M_pad * N_pad * K_pad,
        transcendentals=0,
        bytes_accessed=(
            M_pad * K_pad * x_item * grid[1]      # x re-read once per N tile
            + K_pad * N_pad * w_item * grid[0]    # weight re-read once per M tile
            + N_pad * b_item * grid[0]            # bias (tiny)
            + M_pad * N_pad * out_item            # output written once
        ),
    )

    vmem_limit = _vmem_limit_bytes(gen, tm, tn, tk, x_item, w_item, out_item, needs_acc)

    y_p = pl.pallas_call(
        kernel,
        out_shape=jax.ShapeDtypeStruct((M_pad, N_pad), out_dtype),
        grid_spec=pltpu.PrefetchScalarGridSpec(
            num_scalar_prefetch=0,
            grid=grid,
            in_specs=[
                pl.BlockSpec((tm, tk), lambda i, j, k: (i, k)),   # x tile
                pl.BlockSpec((tk, tn), lambda i, j, k: (k, j)),   # weight tile (K, N)
                pl.BlockSpec((1, tn), lambda i, j, k: (0, j)),    # bias tile
            ],
            out_specs=pl.BlockSpec((tm, tn), lambda i, j, k: (i, j)),
            scratch_shapes=scratch_shapes,
        ),
        compiler_params=pltpu.CompilerParams(
            dimension_semantics=("parallel", "parallel", "arbitrary"),
            vmem_limit_bytes=vmem_limit,
        ),
        cost_estimate=cost,
    )(x2, w_p, b_p)

    # Slice away padding only when padding exists (elide the extra HBM pass).
    if M_pad != M or N_pad != n_out:
        y = y_p[:M, :n_out]
    else:
        y = y_p
    return y.reshape(*lead, n_out)


class PallasLinear:
    """Pallas TPU equivalent of the PyTorch `Linear` module (y = x @ W.T + b)."""

    def __init__(self, weight, bias):
        self.out_features = int(weight.shape[0])
        self.in_features = int(weight.shape[1])
        # One-time: transpose + pad parameters (hoisted out of the call path).
        self.w_p, self.b_p = prepare_linear_params(weight, bias)

    def __call__(self, x):
        return linear_forward(x, self.w_p, self.b_p, self.out_features)


def init_linear_params(key, in_features, out_features):
    """PyTorch-style deterministic init: U(-1/sqrt(in), 1/sqrt(in))."""
    kw, kb = jax.random.split(key)
    bound = 1.0 / jnp.sqrt(jnp.float32(in_features))
    weight = jax.random.uniform(
        kw, (out_features, in_features), jnp.float32, -bound, bound
    )
    bias = jax.random.uniform(kb, (out_features,), jnp.float32, -bound, bound)
    return weight, bias


if __name__ == "__main__":
    key = jax.random.PRNGKey(0)
    k_x, k_p, k_x2, k_p2 = jax.random.split(key, 4)

    # Case 1: small aligned-ish shape (pads K/N to 128 lanes).
    batch, in_features, out_features = 8, 32, 64
    x = jax.random.normal(k_x, (batch, in_features), jnp.float32)
    weight, bias = init_linear_params(k_p, in_features, out_features)

    layer = PallasLinear(weight, bias)
    y = jax.block_until_ready(layer(x))
    y_ref = x @ weight.T + bias
    assert y.shape == (batch, out_features)
    assert jnp.allclose(y, y_ref, atol=1e-5, rtol=1e-5), "mismatch vs reference (case 1)"

    # Case 2: ragged shapes + leading batch dims (exercises adaptive tm / padding path).
    x2 = jax.random.normal(k_x2, (2, 5, 100), jnp.float32)
    weight2, bias2 = init_linear_params(k_p2, 100, 130)
    layer2 = PallasLinear(weight2, bias2)
    y2 = jax.block_until_ready(layer2(x2))
    y2_ref = x2 @ weight2.T + bias2
    assert y2.shape == (2, 5, 130)
    assert jnp.allclose(y2, y2_ref, atol=1e-4, rtol=1e-4), "mismatch vs reference (case 2)"

    print("KERNEL_OK")
</pallas_src>

<mosaic_0001>
module attributes {stable_mosaic.version = 11 : i64} {
  func.func @_linear_kernel_f32(%arg0: i32, %arg1: i32, %arg2: i32, %arg3: memref<8x128xf32, #tpu.memory_space<vmem>>, %arg4: memref<128x128xf32, #tpu.memory_space<vmem>>, %arg5: memref<1x128xf32, #tpu.memory_space<vmem>>, %arg6: memref<8x128xf32, #tpu.memory_space<vmem>>) attributes {dimension_semantics = [#tpu.dimension_semantics<parallel>, #tpu.dimension_semantics<parallel>, #tpu.dimension_semantics<arbitrary>], iteration_bounds = array<i64: 1, 1, 1>, scalar_prefetch = 0 : i64, scratch_operands = 0 : i64, tpu.core_type = #tpu.core_type<tc>, window_params = [{transform_indices = @transform_0, window_bounds = array<i64: 8, 128>}, {transform_indices = @transform_1, window_bounds = array<i64: 128, 128>}, {transform_indices = @transform_2, window_bounds = array<i64: 1, 128>}, {transform_indices = @transform_3, window_bounds = array<i64: 8, 128>}]} {
    %c0_i32 = arith.constant 0 : i32
    %0 = arith.cmpi eq, %arg2, %c0_i32 : i32
    %1 = arith.extui %0 : i1 to i32
    %c0_i32_0 = arith.constant 0 : i32
    %2 = arith.cmpi ne, %1, %c0_i32_0 : i32
    scf.if %2 {
      %c0_8 = arith.constant 0 : index
      %c0_9 = arith.constant 0 : index
      %9 = vector.load %arg5[%c0_8, %c0_9] : memref<1x128xf32, #tpu.memory_space<vmem>>, vector<1x128xf32>
      %10 = vector.shape_cast %9 : vector<1x128xf32> to vector<1x128xf32>
      %11 = vector.broadcast %10 : vector<1x128xf32> to vector<8x128xf32>
      %c0_10 = arith.constant 0 : index
      %c0_11 = arith.constant 0 : index
      %12 = vector.load %arg6[%c0_10, %c0_11] : memref<8x128xf32, #tpu.memory_space<vmem>>, vector<8x128xf32>
      tpu.vector_store %arg6[%c0_10, %c0_11], %11 {strides = array<i32>} : memref<8x128xf32, #tpu.memory_space<vmem>>, vector<8x128xf32>,
    } else {
    }
    %c0 = arith.constant 0 : index
    %c0_1 = arith.constant 0 : index
    %3 = vector.load %arg6[%c0, %c0_1] : memref<8x128xf32, #tpu.memory_space<vmem>>, vector<8x128xf32>
    %c0_2 = arith.constant 0 : index
    %c0_3 = arith.constant 0 : index
    %4 = vector.load %arg3[%c0_2, %c0_3] : memref<8x128xf32, #tpu.memory_space<vmem>>, vector<8x128xf32>
    %c0_4 = arith.constant 0 : index
    %c0_5 = arith.constant 0 : index
    %5 = vector.load %arg4[%c0_4, %c0_5] : memref<128x128xf32, #tpu.memory_space<vmem>>, vector<128x128xf32>
    %cst = arith.constant dense<0.000000e+00> : vector<8x128xf32>
    %6 = tpu.matmul %4, %5, %cst {dimension_numbers = #tpu.dot_dimension_numbers<[1], [0], [0], [1], [0, 0, 1, 1], [], []>} : vector<8x128xf32>, vector<128x128xf32>, vector<8x128xf32> -> vector<8x128xf32>
    %7 = arith.addf %3, %6 : vector<8x128xf32>
    %c0_6 = arith.constant 0 : index
    %c0_7 = arith.constant 0 : index
    %8 = vector.load %arg6[%c0_6, %c0_7] : memref<8x128xf32, #tpu.memory_space<vmem>>, vector<8x128xf32>
    tpu.vector_store %arg6[%c0_6, %c0_7], %7 {strides = array<i32>} : memref<8x128xf32, #tpu.memory_space<vmem>>, vector<8x128xf32>,
    return
  }
  func.func @transform_0(%arg0: i32, %arg1: i32, %arg2: i32) -> (i32, i32) {
    %c0_i32 = arith.constant 0 : i32
    return %arg0, %arg2 : i32, i32
  }
  func.func @transform_1(%arg0: i32, %arg1: i32, %arg2: i32) -> (i32, i32) {
    %c0_i32 = arith.constant 0 : i32
    return %arg2, %arg1 : i32, i32
  }
  func.func @transform_2(%arg0: i32, %arg1: i32, %arg2: i32) -> (i32, i32) {
    %c0_i32 = arith.constant 0 : i32
    %c0_i32_0 = arith.constant 0 : i32
    return %c0_i32, %arg1 : i32, i32
  }
  func.func @transform_3(%arg0: i32, %arg1: i32, %arg2: i32) -> (i32, i32) {
    %c0_i32 = arith.constant 0 : i32
    return %arg0, %arg1 : i32, i32
  }
}

</mosaic_0001>

<llo_original>
// kernel: linear_forward.1
$region0: #{linear_forward.1}
  #allocation0 [shape = 'u32[]', space=smem, size = 0x4, offset = 0x4, fixed_abs, tag = 'smem constant byte address 0x4 - core index']
  #allocation1 [shape = 'u32[144,128]{1,0:T(1,128)}', space=vmem, size = 0x12000, scoped, tag = 'internal scratch']
  %s0 = inlined_call_operand.vmem [shape: f32[8,128], index: 0, kind: input, shape index: {}]
  %s1 = inlined_call_operand.hbm [shape: f32[128,128], index: 1, kind: input, shape index: {}]
  %s2 = inlined_call_operand.vmem [shape: f32[1,128], index: 2, kind: input, shape index: {}]
  %s3 = inlined_call_operand.hbm [shape: f32[8,128], index: 3, kind: output, shape index: {}]
  %s4 = sld [smem:[#allocation0]]
  $region30: #{linear_forward.1} parent=0
    _
  %s6 = ssub.s32 1, %s4
  %s7 = scalar_select 0, %s6, %s4
  $region1: #{linear_forward.1} parent=0
    #allocation2 [shape = 'u8[65536]{0}', space=vmem, size = 0x10000, scoped, tag = 'input window, operand 1, single buffered']
    #allocation3 [shape = 's32[1]{0}', space=sflag, size = 0x4, scoped, tag = 'scoped memory for linear_forward.1']
    #allocation4 [shape = 's32[1]{0}', space=sflag, size = 0x4, scoped, tag = 'scoped memory for linear_forward.1']
    #allocation5 [shape = 'u8[4096]{0}', space=vmem, size = 0x1000, scoped, tag = 'output window, operand 0, single buffered']
    %8 = vsyncpa [#allocation3], 0
    %9 = vsyncpa [#allocation4], 0
    // Predicated region
    $region2: #{linear_forward.1} parent=1 // pred_check
      _
    $region3: #{linear_forward.1} parent=1 // pred_check_branch
      %11 = sbr.rel (0) target = $region5
    $region4: #{linear_forward.1} parent=1 // pred_region
      _
    $region5: #{linear_forward.1} parent=1 // pred_fallthru
      _
    // Predicated region
    $region6: #{linear_forward.1} parent=1 // pred_check
      _
    $region7: #{linear_forward.1} parent=1 // pred_check_branch
      %13 = sbr.rel (0) target = $region9
    $region8: #{linear_forward.1} parent=1 // pred_region
      %s15 = ssub.s32 2048, 2048
      %16 = vsyncadd [#allocation3], %s15
      %s17 = sshll.u32 [#allocation2], 4
      %s18 = int_to_ptr.vmem [resolvable:$true] %s17
      %23 = dma.hbm_to_vmem [thread:$0]  %s1, 2048, %s18, [#allocation3], 128, 128, 8
    $region9: #{linear_forward.1} parent=1 // pred_fallthru
      _
    // Predicated region
    $region10: #{linear_forward.1} parent=1 // pred_check
      _
    $region11: #{linear_forward.1} parent=1 // pred_check_branch
      %25 = sbr.rel (0) target = $region13
    $region12: #{linear_forward.1} parent=1 // pred_region
      _
    $region13: #{linear_forward.1} parent=1 // pred_fallthru
      _
    // Predicated region
    $region14: #{linear_forward.1} parent=1 // pred_check
      _
    $region15: #{linear_forward.1} parent=1 // pred_check_branch
      %27 = sbr.rel (0) target = $region17
    $region16: #{linear_forward.1} parent=1 // pred_region
      %28 = dma.done [#allocation3], 2048
    $region17: #{linear_forward.1} parent=1 // pred_fallthru
      _
    %p29 = scmp.eq.s32.totalorder 0, 0
    // Predicated region
    $region18: #{linear_forward.1} parent=1 // pred_check
      %p30 = pneg %p29
    $region19: #{linear_forward.1} parent=1 // pred_check_branch
      %32 = sbr.rel (%p30) target = $region21
    $region20: #{linear_forward.1} parent=1 // pred_region
      %v33 = vld [vmem:[%s2] sm:$0x1]
      %v35 = vlaneseq
      %v36 = vshrl.u32 %v35, 7
      %v37 = vsub.s32 0, %v36
      %v38 = vrot.slane %v33, %v37
      %40 = vst [vmem:[#allocation5] sm:$0xff] %v38
    $region21: #{linear_forward.1} parent=1 // pred_fallthru
      _
    %v41 = vld [vmem:[#allocation5] sm:$0xff]
    %v42 = vld [vmem:[%s0] sm:$0xff]
    %v43 = vld [vmem:[#allocation2] sm:$0xff]
    %v44 = vld [vmem:[#allocation2 + $0x8] sm:$0xff]
    %v45 = vld [vmem:[#allocation2 + $0x10] sm:$0xff]
    %v46 = vld [vmem:[#allocation2 + $0x18] sm:$0xff]
    %v47 = vld [vmem:[#allocation2 + $0x20] sm:$0xff]
    %v48 = vld [vmem:[#allocation2 + $0x28] sm:$0xff]
    %v49 = vld [vmem:[#allocation2 + $0x30] sm:$0xff]
    %v50 = vld [vmem:[#allocation2 + $0x38] sm:$0xff]
    %v51 = vld [vmem:[#allocation2 + $0x40] sm:$0xff]
    %v52 = vld [vmem:[#allocation2 + $0x48] sm:$0xff]
    %v53 = vld [vmem:[#allocation2 + $0x50] sm:$0xff]
    %v54 = vld [vmem:[#allocation2 + $0x58] sm:$0xff]
    %v55 = vld [vmem:[#allocation2 + $0x60] sm:$0xff]
    %v56 = vld [vmem:[#allocation2 + $0x68] sm:$0xff]
    %v57 = vld [vmem:[#allocation2 + $0x70] sm:$0xff]
    %v58 = vld [vmem:[#allocation2 + $0x78] sm:$0xff]
    %59 = vmatprep.subr.mxu0 0.0
    %60 = vmatpush1.msra.mxu0 %v43
    %61 = vmatprep.subr.mxu0 0.0
    %62 = vmatpush1.msra.mxu0 %v44
    %63 = vmatprep.subr.mxu0 0.0
    %64 = vmatpush1.msra.mxu0 %v45
    %65 = vmatprep.subr.mxu0 0.0
    %66 = vmatpush1.msra.mxu0 %v46
    %67 = vmatprep.subr.mxu0 0.0
    %68 = vmatpush1.msra.mxu0 %v47
    %69 = vmatprep.subr.mxu0 0.0
    %70 = vmatpush1.msra.mxu0 %v48
    %71 = vmatprep.subr.mxu0 0.0
    %72 = vmatpush1.msra.mxu0 %v49
    %73 = vmatprep.subr.mxu0 0.0
    %74 = vmatpush1.msra.mxu0 %v50
    %75 = vmatprep.subr.mxu0 0.0
    %76 = vmatpush1.msra.mxu0 %v51
    %77 = vmatprep.subr.mxu0 0.0
    %78 = vmatpush1.msra.mxu0 %v52
    %79 = vmatprep.subr.mxu0 0.0
    %80 = vmatpush1.msra.mxu0 %v53
    %81 = vmatprep.subr.mxu0 0.0
    %82 = vmatpush1.msra.mxu0 %v54
    %83 = vmatprep.subr.mxu0 0.0
    %84 = vmatpush1.msra.mxu0 %v55
    %85 = vmatprep.subr.mxu0 0.0
    %86 = vmatpush1.msra.mxu0 %v56
    %87 = vmatprep.subr.mxu0 0.0
    %88 = vmatpush1.msra.mxu0 %v57
    %89 = vmatprep.subr.mxu0 0.0
    %90 = vmatpush1.msra.mxu0 %v58
    %91 = vmatprep.subr.mxu0 0.0
    %92 = vmatpush1.msra.mxu0 0.0
    %93 = vmatprep.subr.mxu0 0.0
    %94 = vmatpush1.msra.mxu0 0.0
    %95 = vmatprep.subr.mxu0 0.0
    %96 = vmatpush1.msra.mxu0 0.0
    %97 = vmatprep.subr.mxu0 0.0
    %98 = vmatpush1.msra.mxu0 0.0
    %99 = vmatprep.subr.mxu0 0.0
    %100 = vmatpush1.msra.mxu0 0.0
    %101 = vmatprep.subr.mxu0 0.0
    %102 = vmatpush1.msra.mxu0 0.0
    %103 = vmatprep.subr.mxu0 0.0
    %104 = vmatpush1.msra.mxu0 0.0
    %105 = vmatprep.subr.mxu0 0.0
    %106 = vmatpush1.msra.mxu0 0.0
    %107 = vmatprep.subr.mxu0 0.0
    %108 = vmatpush1.msra.mxu0 0.0
    %109 = vmatprep.subr.mxu0 0.0
    %110 = vmatpush1.msra.mxu0 0.0
    %111 = vmatprep.subr.mxu0 0.0
    %112 = vmatpush1.msra.mxu0 0.0
    %113 = vmatprep.subr.mxu0 0.0
    %114 = vmatpush1.msra.mxu0 0.0
    %115 = vmatprep.subr.mxu0 0.0
    %116 = vmatpush1.msra.mxu0 0.0
    %117 = vmatprep.subr.mxu0 0.0
    %118 = vmatpush1.msra.mxu0 0.0
    %119 = vmatprep.subr.mxu0 0.0
    %120 = vmatpush1.msra.mxu0 0.0
    %121 = vmatprep.subr.mxu0 0.0
    %122 = vmatpush1.msra.mxu0 0.0
    %123 = vmatprep.mubr.f32.mxu0 0.0
    %124 = vmatmul.mubr.f32.gmra.mrb[0].mxu0 %v42
    %v125 = vpop.f32.mrb[0].mxu0
    %v126 = vadd.f32 0.0, %v125
    %v127 = vpop.f32.mrb[0].mxu0
    %128 = vdwg.mxu0
    %v129 = vadd.f32 %v41, %v126
    %130 = vst [vmem:[#allocation5] sm:$0xff] %v129
    // Predicated region
    $region22: #{linear_forward.1} parent=1 // pred_check
      _
    $region23: #{linear_forward.1} parent=1 // pred_check_branch
      %132 = sbr.rel (0) target = $region25
    $region24: #{linear_forward.1} parent=1 // pred_region
      %s134 = ssub.s32 128, 128
      %135 = vsyncadd [#allocation4], %s134
      %s137 = sshll.u32 [#allocation5], 4
      %s138 = int_to_ptr.vmem [resolvable:$true] %s137
      %140 = dma.vmem_to_hbm [thread:$0]  %s138, 128, %s3, [#allocation4]
    $region25: #{linear_forward.1} parent=1 // pred_fallthru
      _
    // Predicated region
    $region26: #{linear_forward.1} parent=1 // pred_check
      _
    $region27: #{linear_forward.1} parent=1 // pred_check_branch
      %142 = sbr.rel (0) target = $region29
    $region28: #{linear_forward.1} parent=1 // pred_region
      %143 = dma.done [#allocation4], 128
    $region29: #{linear_forward.1} parent=1 // pred_fallthru
      _
    %144 = vsyncpa [#allocation3], 1
    %145 = vsyncpa [#allocation4], 1

</llo_original>
